<compile_context>
chip_gen: v6e
topology: v6e:2x2x1
jax: 0.10.0
libtpu: 0.0.40
codegen_flags: <defaults>
</compile_context>

<pallas_src>
import jax
import jax.numpy as jnp
import numpy as np
from jax.experimental import pallas as pl
from jax.experimental.pallas import tpu as pltpu


# Sizes implied by the module.
IN_H = IN_W = 5
IN_FEAT = IN_H * IN_W          # 25
C1_OUT, C1_K = 10, 3           # conv1: 1->10, 3x3 kernel -> 3x3 map
C2_OUT, C2_K = 32, 2           # conv2: 10->32, 2x2 kernel -> 2x2 map
A1_FEAT = 9 * C1_OUT           # 90  = 3x3 positions x 10 ch (position-major)
A2_FEAT = 4 * C2_OUT           # 128 = 2x2 positions x 32 ch (lane-dense)
H1, H2 = 16, 8                 # MLP head widths


# ------------------------------- fused kernel ------------------------------

def _sigmoid(z):
    # exp goes to the EUP; approx reciprocal lowers to EUP vrcp -> VALU stays free.
    return pl.reciprocal(1.0 + jnp.exp(-z), approx=True)


def _fused_kernel(x_ref, w1_ref, b1_ref, w2_ref, b2_ref, w3_ref, b3_ref,
                  w4_ref, b4_ref, w5_ref, b5_ref, o_ref):
    x = x_ref[...]                                                             # (TB, 25)
    a1 = _sigmoid(jnp.dot(x, w1_ref[...],
                          preferred_element_type=jnp.float32) + b1_ref[...])  # (TB, 90)
    a2 = _sigmoid(jnp.dot(a1, w2_ref[...],
                          preferred_element_type=jnp.float32) + b2_ref[...])  # (TB, 128)
    h1 = _sigmoid(jnp.dot(a2, w3_ref[...],
                          preferred_element_type=jnp.float32) + b3_ref[...])  # (TB, 16)
    h2 = _sigmoid(jnp.dot(h1, w4_ref[...],
                          preferred_element_type=jnp.float32) + b4_ref[...])  # (TB, 8)
    o_ref[...] = jnp.dot(h2, w5_ref[...],
                         preferred_element_type=jnp.float32) + b5_ref[...]    # (TB, 1)


# --------------------- parameter restructuring (one-time) ------------------

def _structured_weights(W1, b1, W2, b2, W3, b3, W4, b4, W5, b5):
    """Turn the convs into dense matmul weights and fold the avg-pool into W3."""
    # conv1 as (25, 90): column index = (oh*3+ow)*10 + c_out
    S1 = np.zeros((IN_FEAT, 9, C1_K * C1_K), np.float32)
    for oh in range(3):
        for ow in range(3):
            p = oh * 3 + ow
            for kh in range(C1_K):
                for kw in range(C1_K):
                    S1[(oh + kh) * IN_W + (ow + kw), p, kh * C1_K + kw] = 1.0
    w1_big = jnp.einsum('ipk,ck->ipc', jnp.asarray(S1),
                        W1.reshape(C1_OUT, C1_K * C1_K)).reshape(IN_FEAT, A1_FEAT)
    b1_big = jnp.tile(b1, 9).reshape(1, A1_FEAT)

    # conv2 as (90, 128): row index = (h*3+w)*10 + c_in, col index = (oh*2+ow)*32 + c_out
    S2 = np.zeros((A1_FEAT, 4, C1_OUT * C2_K * C2_K), np.float32)
    for oh in range(2):
        for ow in range(2):
            q = oh * 2 + ow
            for c in range(C1_OUT):
                for kh in range(C2_K):
                    for kw in range(C2_K):
                        in_idx = ((oh + kh) * 3 + (ow + kw)) * C1_OUT + c
                        S2[in_idx, q, c * (C2_K * C2_K) + kh * C2_K + kw] = 1.0
    w2_big = jnp.einsum('iqk,dk->iqd', jnp.asarray(S2),
                        W2.reshape(C2_OUT, C1_OUT * C2_K * C2_K)).reshape(A1_FEAT, A2_FEAT)
    b2_big = jnp.tile(b2, 4).reshape(1, A2_FEAT)

    # AvgPool2d(2,2) on the 2x2 map == 0.25 * sum over the 4 positions -> fold into W3.
    w3_fold = 0.25 * jnp.tile(W3.T, (4, 1))            # (128, 16)

    return (w1_big, b1_big, w2_big, b2_big,
            w3_fold, b3.reshape(1, H1),
            W4.T, b4.reshape(1, H2),
            W5.T, b5.reshape(1, 1))


# ------------------------------ forward pass -------------------------------

def _round_up(x, m):
    return (x + m - 1) // m * m


def forward(X, params, *, block_b=1024):
    """X: NCHW (B, 1, 5, 5) float32 -> (B, 1) float32. Single fused Pallas kernel."""
    W = _structured_weights(*params)
    B = X.shape[0]
    x = X.reshape(B, IN_FEAT).astype(jnp.float32)

    # Batch tile: sublane-aligned; ~1.1 MB of activations per 1024-row tile plus
    # ~64 KB of resident weights -> comfortably within v7x's scoped VMEM while
    # amortizing the ~0.35 us per-grid-step overhead.
    tb = min(block_b, _round_up(B, 8))
    Bp = _round_up(B, tb)
    if Bp != B:
        x = jnp.pad(x, ((0, Bp - B), (0, 0)))

    const = lambda arr: pl.BlockSpec(arr.shape, lambda i: (0, 0))  # resident weights
    in_specs = [pl.BlockSpec((tb, IN_FEAT), lambda i: (i, 0))] + [const(w) for w in W]

    out = pl.pallas_call(
        _fused_kernel,
        out_shape=jax.ShapeDtypeStruct((Bp, 1), jnp.float32),
        grid=(Bp // tb,),
        in_specs=in_specs,
        out_specs=pl.BlockSpec((tb, 1), lambda i: (i, 0)),
        compiler_params=pltpu.CompilerParams(
            dimension_semantics=("parallel",)),   # 2x on v7x (2 TCs), neutral elsewhere
    )(x, *W)
    return out[:B]


# ------------------------- deterministic parameters ------------------------

def init_params(key):
    ks = jax.random.split(key, 10)
    s = 0.1
    W1 = s * jax.random.normal(ks[0], (10, 1, 3, 3), jnp.float32)
    b1 = s * jax.random.normal(ks[1], (10,), jnp.float32)
    W2 = s * jax.random.normal(ks[2], (32, 10, 2, 2), jnp.float32)
    b2 = s * jax.random.normal(ks[3], (32,), jnp.float32)
    W3 = s * jax.random.normal(ks[4], (16, 32), jnp.float32)
    b3 = s * jax.random.normal(ks[5], (16,), jnp.float32)
    W4 = s * jax.random.normal(ks[6], (8, 16), jnp.float32)
    b4 = s * jax.random.normal(ks[7], (8,), jnp.float32)
    W5 = s * jax.random.normal(ks[8], (1, 8), jnp.float32)
    b5 = s * jax.random.normal(ks[9], (1,), jnp.float32)
    return (W1, b1, W2, b2, W3, b3, W4, b4, W5, b5)


def ref_forward(X, params):
    """Pure-JAX reference mirroring the PyTorch module exactly."""
    W1, b1, W2, b2, W3, b3, W4, b4, W5, b5 = params
    dn = ('NCHW', 'OIHW', 'NCHW')
    y = jax.lax.conv_general_dilated(X, W1, (1, 1), 'VALID', dimension_numbers=dn)
    y = jax.nn.sigmoid(y + b1[None, :, None, None])
    y = jax.lax.conv_general_dilated(y, W2, (1, 1), 'VALID', dimension_numbers=dn)
    y = jax.nn.sigmoid(y + b2[None, :, None, None])
    y = jnp.mean(y, axis=(2, 3))                       # AvgPool2d(2,2) on 2x2 map + Flatten
    y = jax.nn.sigmoid(y @ W3.T + b3)
    y = jax.nn.sigmoid(y @ W4.T + b4)
    return y @ W5.T + b5


if __name__ == "__main__":
    key = jax.random.PRNGKey(0)
    pkey, xkey = jax.random.split(key)
    params = init_params(pkey)

    B = 2
    X = jax.random.normal(xkey, (B, 1, 5, 5), jnp.float32)   # NCHW, as PyTorch expects

    fwd = jax.jit(forward)
    out = jax.block_until_ready(fwd(X, params))
    assert out.shape == (B, 1) and out.dtype == jnp.float32

    ref = jax.block_until_ready(ref_forward(X, params))
    assert jnp.allclose(out, ref, atol=1e-2, rtol=1e-2), (out, ref)

    print("KERNEL_OK")
</pallas_src>

<mosaic_0001>
module attributes {stable_mosaic.version = 11 : i64} {
  func.func @_fused_kernel(%arg0: i32, %arg1: memref<8x25xf32, #tpu.memory_space<vmem>>, %arg2: memref<25x90xf32, #tpu.memory_space<vmem>>, %arg3: memref<1x90xf32, #tpu.memory_space<vmem>>, %arg4: memref<90x128xf32, #tpu.memory_space<vmem>>, %arg5: memref<1x128xf32, #tpu.memory_space<vmem>>, %arg6: memref<128x16xf32, #tpu.memory_space<vmem>>, %arg7: memref<1x16xf32, #tpu.memory_space<vmem>>, %arg8: memref<16x8xf32, #tpu.memory_space<vmem>>, %arg9: memref<1x8xf32, #tpu.memory_space<vmem>>, %arg10: memref<8x1xf32, #tpu.memory_space<vmem>>, %arg11: memref<1x1xf32, #tpu.memory_space<vmem>>, %arg12: memref<8x1xf32, #tpu.memory_space<vmem>>) attributes {dimension_semantics = [#tpu.dimension_semantics<parallel>], iteration_bounds = array<i64: 1>, scalar_prefetch = 0 : i64, scratch_operands = 0 : i64, tpu.core_type = #tpu.core_type<tc>, window_params = [{transform_indices = @transform_0, window_bounds = array<i64: 8, 25>}, {pipeline_mode = #tpu.pipeline_mode<synchronous>, transform_indices = @transform_1, window_bounds = array<i64: 25, 90>}, {pipeline_mode = #tpu.pipeline_mode<synchronous>, transform_indices = @transform_2, window_bounds = array<i64: 1, 90>}, {pipeline_mode = #tpu.pipeline_mode<synchronous>, transform_indices = @transform_3, window_bounds = array<i64: 90, 128>}, {pipeline_mode = #tpu.pipeline_mode<synchronous>, transform_indices = @transform_4, window_bounds = array<i64: 1, 128>}, {pipeline_mode = #tpu.pipeline_mode<synchronous>, transform_indices = @transform_5, window_bounds = array<i64: 128, 16>}, {pipeline_mode = #tpu.pipeline_mode<synchronous>, transform_indices = @transform_6, window_bounds = array<i64: 1, 16>}, {pipeline_mode = #tpu.pipeline_mode<synchronous>, transform_indices = @transform_7, window_bounds = array<i64: 16, 8>}, {pipeline_mode = #tpu.pipeline_mode<synchronous>, transform_indices = @transform_8, window_bounds = array<i64: 1, 8>}, {pipeline_mode = #tpu.pipeline_mode<synchronous>, transform_indices = @transform_9, window_bounds = array<i64: 8, 1>}, {pipeline_mode = #tpu.pipeline_mode<synchronous>, transform_indices = @transform_10, window_bounds = array<i64: 1, 1>}, {transform_indices = @transform_11, window_bounds = array<i64: 8, 1>}]} {
    %c0 = arith.constant 0 : index
    %c0_0 = arith.constant 0 : index
    %0 = vector.load %arg1[%c0, %c0_0] : memref<8x25xf32, #tpu.memory_space<vmem>>, vector<8x25xf32>
    %c0_1 = arith.constant 0 : index
    %c0_2 = arith.constant 0 : index
    %1 = vector.load %arg2[%c0_1, %c0_2] : memref<25x90xf32, #tpu.memory_space<vmem>>, vector<25x90xf32>
    %cst = arith.constant dense<0.000000e+00> : vector<8x90xf32>
    %2 = tpu.matmul %0, %1, %cst {dimension_numbers = #tpu.dot_dimension_numbers<[1], [0], [0], [1], [0, 0, 1, 1], [], []>} : vector<8x25xf32>, vector<25x90xf32>, vector<8x90xf32> -> vector<8x90xf32>
    %c0_3 = arith.constant 0 : index
    %c0_4 = arith.constant 0 : index
    %3 = vector.load %arg3[%c0_3, %c0_4] : memref<1x90xf32, #tpu.memory_space<vmem>>, vector<1x90xf32>
    %4 = vector.broadcast %3 : vector<1x90xf32> to vector<8x90xf32>
    %5 = arith.addf %2, %4 : vector<8x90xf32>
    %cst_5 = arith.constant 0.000000e+00 : f32
    %6 = vector.broadcast %cst_5 : f32 to vector<8x90xf32>
    %7 = arith.subf %6, %5 : vector<8x90xf32>
    %8 = math.exp %7 : vector<8x90xf32>
    %cst_6 = arith.constant 1.000000e+00 : f32
    %9 = vector.broadcast %cst_6 : f32 to vector<8x90xf32>
    %10 = arith.addf %9, %8 : vector<8x90xf32>
    %11 = tpu.reciprocal %10 {approx = true} : vector<8x90xf32> -> vector<8x90xf32>
    %c0_7 = arith.constant 0 : index
    %c0_8 = arith.constant 0 : index
    %12 = vector.load %arg4[%c0_7, %c0_8] : memref<90x128xf32, #tpu.memory_space<vmem>>, vector<90x128xf32>
    %cst_9 = arith.constant dense<0.000000e+00> : vector<8x128xf32>
    %13 = tpu.matmul %11, %12, %cst_9 {dimension_numbers = #tpu.dot_dimension_numbers<[1], [0], [0], [1], [0, 0, 1, 1], [], []>} : vector<8x90xf32>, vector<90x128xf32>, vector<8x128xf32> -> vector<8x128xf32>
    %c0_10 = arith.constant 0 : index
    %c0_11 = arith.constant 0 : index
    %14 = vector.load %arg5[%c0_10, %c0_11] : memref<1x128xf32, #tpu.memory_space<vmem>>, vector<1x128xf32>
    %15 = vector.broadcast %14 : vector<1x128xf32> to vector<8x128xf32>
    %16 = arith.addf %13, %15 : vector<8x128xf32>
    %cst_12 = arith.constant 0.000000e+00 : f32
    %17 = vector.broadcast %cst_12 : f32 to vector<8x128xf32>
    %18 = arith.subf %17, %16 : vector<8x128xf32>
    %19 = math.exp %18 : vector<8x128xf32>
    %cst_13 = arith.constant 1.000000e+00 : f32
    %20 = vector.broadcast %cst_13 : f32 to vector<8x128xf32>
    %21 = arith.addf %20, %19 : vector<8x128xf32>
    %22 = tpu.reciprocal %21 {approx = true} : vector<8x128xf32> -> vector<8x128xf32>
    %c0_14 = arith.constant 0 : index
    %c0_15 = arith.constant 0 : index
    %23 = vector.load %arg6[%c0_14, %c0_15] : memref<128x16xf32, #tpu.memory_space<vmem>>, vector<128x16xf32>
    %cst_16 = arith.constant dense<0.000000e+00> : vector<8x16xf32>
    %24 = tpu.matmul %22, %23, %cst_16 {dimension_numbers = #tpu.dot_dimension_numbers<[1], [0], [0], [1], [0, 0, 1, 1], [], []>} : vector<8x128xf32>, vector<128x16xf32>, vector<8x16xf32> -> vector<8x16xf32>
    %c0_17 = arith.constant 0 : index
    %c0_18 = arith.constant 0 : index
    %25 = vector.load %arg7[%c0_17, %c0_18] : memref<1x16xf32, #tpu.memory_space<vmem>>, vector<1x16xf32>
    %26 = vector.broadcast %25 : vector<1x16xf32> to vector<8x16xf32>
    %27 = arith.addf %24, %26 : vector<8x16xf32>
    %cst_19 = arith.constant 0.000000e+00 : f32
    %28 = vector.broadcast %cst_19 : f32 to vector<8x16xf32>
    %29 = arith.subf %28, %27 : vector<8x16xf32>
    %30 = math.exp %29 : vector<8x16xf32>
    %cst_20 = arith.constant 1.000000e+00 : f32
    %31 = vector.broadcast %cst_20 : f32 to vector<8x16xf32>
    %32 = arith.addf %31, %30 : vector<8x16xf32>
    %33 = tpu.reciprocal %32 {approx = true} : vector<8x16xf32> -> vector<8x16xf32>
    %c0_21 = arith.constant 0 : index
    %c0_22 = arith.constant 0 : index
    %34 = vector.load %arg8[%c0_21, %c0_22] : memref<16x8xf32, #tpu.memory_space<vmem>>, vector<16x8xf32>
    %cst_23 = arith.constant dense<0.000000e+00> : vector<8x8xf32>
    %35 = tpu.matmul %33, %34, %cst_23 {dimension_numbers = #tpu.dot_dimension_numbers<[1], [0], [0], [1], [0, 0, 1, 1], [], []>} : vector<8x16xf32>, vector<16x8xf32>, vector<8x8xf32> -> vector<8x8xf32>
    %c0_24 = arith.constant 0 : index
    %c0_25 = arith.constant 0 : index
    %36 = vector.load %arg9[%c0_24, %c0_25] : memref<1x8xf32, #tpu.memory_space<vmem>>, vector<1x8xf32>
    %37 = vector.broadcast %36 : vector<1x8xf32> to vector<8x8xf32>
    %38 = arith.addf %35, %37 : vector<8x8xf32>
    %cst_26 = arith.constant 0.000000e+00 : f32
    %39 = vector.broadcast %cst_26 : f32 to vector<8x8xf32>
    %40 = arith.subf %39, %38 : vector<8x8xf32>
    %41 = math.exp %40 : vector<8x8xf32>
    %cst_27 = arith.constant 1.000000e+00 : f32
    %42 = vector.broadcast %cst_27 : f32 to vector<8x8xf32>
    %43 = arith.addf %42, %41 : vector<8x8xf32>
    %44 = tpu.reciprocal %43 {approx = true} : vector<8x8xf32> -> vector<8x8xf32>
    %c0_28 = arith.constant 0 : index
    %c0_29 = arith.constant 0 : index
    %45 = vector.load %arg10[%c0_28, %c0_29] : memref<8x1xf32, #tpu.memory_space<vmem>>, vector<8x1xf32>
    %cst_30 = arith.constant dense<0.000000e+00> : vector<8x1xf32>
    %46 = tpu.matmul %44, %45, %cst_30 {dimension_numbers = #tpu.dot_dimension_numbers<[1], [0], [0], [1], [0, 0, 1, 1], [], []>} : vector<8x8xf32>, vector<8x1xf32>, vector<8x1xf32> -> vector<8x1xf32>
    %c0_31 = arith.constant 0 : index
    %c0_32 = arith.constant 0 : index
    %47 = vector.load %arg11[%c0_31, %c0_32] : memref<1x1xf32, #tpu.memory_space<vmem>>, vector<1x1xf32>
    %48 = vector.broadcast %47 : vector<1x1xf32> to vector<8x1xf32>
    %49 = arith.addf %46, %48 : vector<8x1xf32>
    %c0_33 = arith.constant 0 : index
    %c0_34 = arith.constant 0 : index
    %50 = vector.load %arg12[%c0_33, %c0_34] : memref<8x1xf32, #tpu.memory_space<vmem>>, vector<8x1xf32>
    tpu.vector_store %arg12[%c0_33, %c0_34], %49 {strides = array<i32>} : memref<8x1xf32, #tpu.memory_space<vmem>>, vector<8x1xf32>,
    return
  }
  func.func @transform_0(%arg0: i32) -> (i32, i32) {
    %c0_i32 = arith.constant 0 : i32
    %c0_i32_0 = arith.constant 0 : i32
    return %arg0, %c0_i32 : i32, i32
  }
  func.func @transform_1(%arg0: i32) -> (i32, i32) {
    %c0_i32 = arith.constant 0 : i32
    %c0_i32_0 = arith.constant 0 : i32
    %c0_i32_1 = arith.constant 0 : i32
    return %c0_i32, %c0_i32_0 : i32, i32
  }
  func.func @transform_2(%arg0: i32) -> (i32, i32) {
    %c0_i32 = arith.constant 0 : i32
    %c0_i32_0 = arith.constant 0 : i32
    %c0_i32_1 = arith.constant 0 : i32
    return %c0_i32, %c0_i32_0 : i32, i32
  }
  func.func @transform_3(%arg0: i32) -> (i32, i32) {
    %c0_i32 = arith.constant 0 : i32
    %c0_i32_0 = arith.constant 0 : i32
    %c0_i32_1 = arith.constant 0 : i32
    return %c0_i32, %c0_i32_0 : i32, i32
  }
  func.func @transform_4(%arg0: i32) -> (i32, i32) {
    %c0_i32 = arith.constant 0 : i32
    %c0_i32_0 = arith.constant 0 : i32
    %c0_i32_1 = arith.constant 0 : i32
    return %c0_i32, %c0_i32_0 : i32, i32
  }
  func.func @transform_5(%arg0: i32) -> (i32, i32) {
    %c0_i32 = arith.constant 0 : i32
    %c0_i32_0 = arith.constant 0 : i32
    %c0_i32_1 = arith.constant 0 : i32
    return %c0_i32, %c0_i32_0 : i32, i32
  }
  func.func @transform_6(%arg0: i32) -> (i32, i32) {
    %c0_i32 = arith.constant 0 : i32
    %c0_i32_0 = arith.constant 0 : i32
    %c0_i32_1 = arith.constant 0 : i32
    return %c0_i32, %c0_i32_0 : i32, i32
  }
  func.func @transform_7(%arg0: i32) -> (i32, i32) {
    %c0_i32 = arith.constant 0 : i32
    %c0_i32_0 = arith.constant 0 : i32
    %c0_i32_1 = arith.constant 0 : i32
    return %c0_i32, %c0_i32_0 : i32, i32
  }
  func.func @transform_8(%arg0: i32) -> (i32, i32) {
    %c0_i32 = arith.constant 0 : i32
    %c0_i32_0 = arith.constant 0 : i32
    %c0_i32_1 = arith.constant 0 : i32
    return %c0_i32, %c0_i32_0 : i32, i32
  }
  func.func @transform_9(%arg0: i32) -> (i32, i32) {
    %c0_i32 = arith.constant 0 : i32
    %c0_i32_0 = arith.constant 0 : i32
    %c0_i32_1 = arith.constant 0 : i32
    return %c0_i32, %c0_i32_0 : i32, i32
  }
  func.func @transform_10(%arg0: i32) -> (i32, i32) {
    %c0_i32 = arith.constant 0 : i32
    %c0_i32_0 = arith.constant 0 : i32
    %c0_i32_1 = arith.constant 0 : i32
    return %c0_i32, %c0_i32_0 : i32, i32
  }
  func.func @transform_11(%arg0: i32) -> (i32, i32) {
    %c0_i32 = arith.constant 0 : i32
    %c0_i32_0 = arith.constant 0 : i32
    return %arg0, %c0_i32 : i32, i32
  }
}

</mosaic_0001>

<llo_original>
// kernel: tile.18
$region0: #{tile.18}
  #allocation0 [shape = 's32[1]{0}', space=sflag, size = 0x4, scoped, tag = 'scoped memory for tile.18']
  %s0 = inlined_call_operand.vmem [shape: f32[10], index: 0, kind: input, shape index: {}]
  %s1 = inlined_call_operand.vmem [shape: f32[9,10], index: 1, kind: output, shape index: {}]
  // Predicated region
  $region2: #{tile.18} parent=0 // pred_check
    _
  $region3: #{tile.18} parent=0 // pred_check_branch
    %3 = sbr.rel (0) target = $region5
  $region4: #{tile.18} parent=0 // pred_region
    _
  $region5: #{tile.18} parent=0 // pred_fallthru
    _
  %v4 = vld [vmem:[%s0] ss:$0 sm:$0xff]
  %5 = vst [vmem:[%s1] sm:$0xff] %v4
  %s6 = scalar_lea.vmem %s1, 8
  %7 = vst [vmem:[%s6] sm:$0xff] %v4

// kernel: tile.19
$region0: #{tile.19}
  %s0 = inlined_call_operand.vmem [shape: f32[9,10], index: 0, kind: input, shape index: {}]
  %s1 = inlined_call_operand.vmem [shape: f32[1,90], index: 1, kind: output, shape index: {}]
  $region1: #{tile.19} parent=0
    #allocation0 [shape = 'u8[4096]{0}', space=vmem, size = 0x1000, scoped, tag = 'scoped mem for output reshape']
    %v2 = vld [vmem:[%s0] sm:$0x1]
    %vm3 = vcmask 80896
    %4 = vst.msk [vmem:[#allocation0] sm:$0x1] %vm3, %v2
    %s5 = scalar_lea.vmem %s0, 8
    %v6 = vld [vmem:[%s5] sm:$0x1]
    %7 = vrot.lane.b32.xlu0 %v6, 80
    %v8 = vpop.permute.xlu0 %7
    %vm9 = vcmask 736896
    %10 = vst.msk [vmem:[#allocation0] sm:$0x1] %vm9, %v8
    %s11 = scalar_lea.vmem %s0, 7
    %v12 = vld [vmem:[%s11] sm:$0x1]
    %13 = vrot.lane.b32.xlu0 %v12, 70
    %v14 = vpop.permute.xlu0 %13
    %vm15 = vcmask 654896
    %16 = vst.msk [vmem:[#allocation0] sm:$0x1] %vm15, %v14
    %s17 = scalar_lea.vmem %s0, 6
    %v18 = vld [vmem:[%s17] sm:$0x1]
    %19 = vrot.lane.b32.xlu0 %v18, 60
    %v20 = vpop.permute.xlu0 %19
    %vm21 = vcmask 572896
    %22 = vst.msk [vmem:[#allocation0] sm:$0x1] %vm21, %v20
    %s23 = scalar_lea.vmem %s0, 5
    %v24 = vld [vmem:[%s23] sm:$0x1]
    %25 = vrot.lane.b32.xlu0 %v24, 50
    %v26 = vpop.permute.xlu0 %25
    %vm27 = vcmask 490896
    %28 = vst.msk [vmem:[#allocation0] sm:$0x1] %vm27, %v26
    %s29 = scalar_lea.vmem %s0, 4
    %v30 = vld [vmem:[%s29] sm:$0x1]
    %31 = vrot.lane.b32.xlu0 %v30, 40
    %v32 = vpop.permute.xlu0 %31
    %vm33 = vcmask 408896
    %34 = vst.msk [vmem:[#allocation0] sm:$0x1] %vm33, %v32
    %s35 = scalar_lea.vmem %s0, 3
    %v36 = vld [vmem:[%s35] sm:$0x1]
    %37 = vrot.lane.b32.xlu0 %v36, 30
    %v38 = vpop.permute.xlu0 %37
    %vm39 = vcmask 326896
    %40 = vst.msk [vmem:[#allocation0] sm:$0x1] %vm39, %v38
    %s41 = scalar_lea.vmem %s0, 2
    %v42 = vld [vmem:[%s41] sm:$0x1]
    %43 = vrot.lane.b32.xlu0 %v42, 20
    %v44 = vpop.permute.xlu0 %43
    %vm45 = vcmask 244896
    %46 = vst.msk [vmem:[#allocation0] sm:$0x1] %vm45, %v44
    %s47 = scalar_lea.vmem %s0, 1
    %v48 = vld [vmem:[%s47] sm:$0x1]
    %49 = vrot.lane.b32.xlu0 %v48, 10
    %v50 = vpop.permute.xlu0 %49
    %vm51 = vcmask 162896
    %52 = vst.msk [vmem:[#allocation0] sm:$0x1] %vm51, %v50
    %s54 = sshll.u32 1, 1
    %s55 = ssub.s32 %s54, 1
    %v57 = vld [vmem:[#allocation0] sm:%s55]
    %s58 = sshll.u32 1, 1
    %s59 = ssub.s32 %s58, 1
    %60 = vst [vmem:[%s1] sm:%s59] %v57

// kernel: tile.23
$region0: #{tile.23}
  #allocation0 [shape = 's32[1]{0}', space=sflag, size = 0x4, scoped, tag = 'scoped memory for tile.23']
  %s0 = inlined_call_operand.vmem [shape: f32[32], index: 0, kind: input, shape index: {}]
  %s1 = inlined_call_operand.vmem [shape: f32[4,32], index: 1, kind: output, shape index: {}]
  // Predicated region
  $region2: #{tile.23} parent=0 // pred_check
    _
  $region3: #{tile.23} parent=0 // pred_check_branch
    %3 = sbr.rel (0) target = $region5
  $region4: #{tile.23} parent=0 // pred_region
    _
  $region5: #{tile.23} parent=0 // pred_fallthru
    _
  %v4 = vld [vmem:[%s0] ss:$0 sm:$0xff]
  %5 = vst [vmem:[%s1] sm:$0xf] %v4

// kernel: tile.24
$region0: #{tile.24}
  %s0 = inlined_call_operand.vmem [shape: f32[4,32], index: 0, kind: input, shape index: {}]
  %s1 = inlined_call_operand.vmem [shape: f32[1,128], index: 1, kind: output, shape index: {}]
  $region1: #{tile.24} parent=0
    #allocation0 [shape = 'u8[4096]{0}', space=vmem, size = 0x1000, scoped, tag = 'scoped mem for output reshape']
    #allocation1 [shape = 'u8[4096]{0}', space=vmem, size = 0x1000, scoped, tag = 'scoped mem for input reshape']
    %s3 = sshll.u32 1, 4
    %s4 = ssub.s32 %s3, 1
    %v5 = vld [vmem:[%s0] sm:%s4]
    %6 = vst [vmem:[#allocation1] sm:%s4] %v5
    %v7 = vld [vmem:[#allocation1] sm:$0x1]
    %vm8 = vcmask 261120
    %9 = vst.msk [vmem:[#allocation0] sm:$0x1] %vm8, %v7
    %s10 = scalar_lea.vmem [#allocation1], 3
    %v11 = vld [vmem:[%s10] sm:$0x1]
    %12 = vrot.lane.b32.xlu0 %v11, 96
    %v13 = vpop.permute.xlu0 %12
    %vm14 = vcmask 1048320
    %15 = vst.msk [vmem:[#allocation0] sm:$0x1] %vm14, %v13
    %s16 = scalar_lea.vmem [#allocation1], 2
    %v17 = vld [vmem:[%s16] sm:$0x1]
    %18 = vrot.lane.b32.xlu0 %v17, 64
    %v19 = vpop.permute.xlu0 %18
    %vm20 = vcmask 785920
    %21 = vst.msk [vmem:[#allocation0] sm:$0x1] %vm20, %v19
    %s22 = scalar_lea.vmem [#allocation1], 1
    %v23 = vld [vmem:[%s22] sm:$0x1]
    %24 = vrot.lane.b32.xlu0 %v23, 32
    %v25 = vpop.permute.xlu0 %24
    %vm26 = vcmask 523520
    %27 = vst.msk [vmem:[#allocation0] sm:$0x1] %vm26, %v25
    %s29 = sshll.u32 1, 1
    %s30 = ssub.s32 %s29, 1
    %v32 = vld [vmem:[#allocation0] sm:%s30]
    %s33 = sshll.u32 1, 1
    %s34 = ssub.s32 %s33, 1
    %35 = vst [vmem:[%s1] sm:%s34] %v32

// kernel: forward.1
$region0: #{forward.1}
  #allocation0 [shape = 'u32[]', space=smem, size = 0x4, offset = 0x4, fixed_abs, tag = 'smem constant byte address 0x4 - core index']
  #allocation1 [shape = 'u32[144,128]{1,0:T(1,128)}', space=vmem, size = 0x12000, scoped, tag = 'internal scratch']
  #allocation2 [shape = 'f32[1,1]{1,0:T(1,128)S(1)}', space=vmem, size = 0x200, scoped, tag = 'scoped memory for forward.1']
  %s0 = inlined_call_operand.vmem [shape: f32[8,25], index: 0, kind: input, shape index: {}]
  %s1 = inlined_call_operand.vmem [shape: f32[25,90], index: 1, kind: input, shape index: {}]
  %s2 = inlined_call_operand.vmem [shape: f32[1,90], index: 2, kind: input, shape index: {}]
  %s3 = inlined_call_operand.vmem [shape: f32[90,128], index: 3, kind: input, shape index: {}]
  %s4 = inlined_call_operand.vmem [shape: f32[1,128], index: 4, kind: input, shape index: {}]
  %s5 = inlined_call_operand.vmem [shape: f32[128,16], index: 5, kind: input, shape index: {}]
  %s6 = inlined_call_operand.vmem [shape: f32[1,16], index: 6, kind: input, shape index: {}]
  %s7 = inlined_call_operand.vmem [shape: f32[16,8], index: 7, kind: input, shape index: {}]
  %s8 = inlined_call_operand.vmem [shape: f32[1,8], index: 8, kind: input, shape index: {}]
  %s9 = inlined_call_operand.vmem [shape: f32[8,1], index: 9, kind: input, shape index: {}]
  %s10 = inlined_call_operand.<no memory space> [shape: f32[1,1], index: 10, kind: input, shape index: {}]
  %s11 = inlined_call_operand.vmem [shape: f32[8,1], index: 11, kind: output, shape index: {}]
  %s12 = sld [smem:[#allocation0]]
  $region54: #{forward.1} parent=0
    _
  %s14 = ssub.s32 1, %s12
  %s15 = scalar_select 0, %s14, %s12
  %v16 = vstv %s10
  %17 = vst [vmem:[#allocation2] sm:$0x1] %v16
  // Predicated region
  $region2: #{forward.1} parent=0 // pred_check
    _
  $region3: #{forward.1} parent=0 // pred_check_branch
    %19 = sbr.rel (0) target = $region5
  $region4: #{forward.1} parent=0 // pred_region
    _
  $region5: #{forward.1} parent=0 // pred_fallthru
    _
  // Predicated region
  $region6: #{forward.1} parent=0 // pred_check
    _
  $region7: #{forward.1} parent=0 // pred_check_branch
    %21 = sbr.rel (0) target = $region9
  $region8: #{forward.1} parent=0 // pred_region
    _
  $region9: #{forward.1} parent=0 // pred_fallthru
    _
  // Predicated region
  $region10: #{forward.1} parent=0 // pred_check
    _
  $region11: #{forward.1} parent=0 // pred_check_branch
    %23 = sbr.rel (0) target = $region13
  $region12: #{forward.1} parent=0 // pred_region
    _
  $region13: #{forward.1} parent=0 // pred_fallthru
    _
  // Predicated region
  $region14: #{forward.1} parent=0 // pred_check
    _
  $region15: #{forward.1} parent=0 // pred_check_branch
    %25 = sbr.rel (0) target = $region17
  $region16: #{forward.1} parent=0 // pred_region
    _
  $region17: #{forward.1} parent=0 // pred_fallthru
    _
  // Predicated region
  $region18: #{forward.1} parent=0 // pred_check
    _
  $region19: #{forward.1} parent=0 // pred_check_branch
    %27 = sbr.rel (0) target = $region21
  $region20: #{forward.1} parent=0 // pred_region
    _
  $region21: #{forward.1} parent=0 // pred_fallthru
    _
  // Predicated region
  $region22: #{forward.1} parent=0 // pred_check
    _
  $region23: #{forward.1} parent=0 // pred_check_branch
    %29 = sbr.rel (0) target = $region25
  $region24: #{forward.1} parent=0 // pred_region
    _
  $region25: #{forward.1} parent=0 // pred_fallthru
    _
  // Predicated region
  $region26: #{forward.1} parent=0 // pred_check
    _
  $region27: #{forward.1} parent=0 // pred_check_branch
    %31 = sbr.rel (0) target = $region29
  $region28: #{forward.1} parent=0 // pred_region
    _
  $region29: #{forward.1} parent=0 // pred_fallthru
    _
  // Predicated region
  $region30: #{forward.1} parent=0 // pred_check
    _
  $region31: #{forward.1} parent=0 // pred_check_branch
    %33 = sbr.rel (0) target = $region33
  $region32: #{forward.1} parent=0 // pred_region
    _
  $region33: #{forward.1} parent=0 // pred_fallthru
    _
  // Predicated region
  $region34: #{forward.1} parent=0 // pred_check
    _
  $region35: #{forward.1} parent=0 // pred_check_branch
    %35 = sbr.rel (0) target = $region37
  $region36: #{forward.1} parent=0 // pred_region
    _
  $region37: #{forward.1} parent=0 // pred_fallthru
    _
  // Predicated region
  $region38: #{forward.1} parent=0 // pred_check
    _
  $region39: #{forward.1} parent=0 // pred_check_branch
    %37 = sbr.rel (0) target = $region41
  $region40: #{forward.1} parent=0 // pred_region
    _
  $region41: #{forward.1} parent=0 // pred_fallthru
    _
  // Predicated region
  $region42: #{forward.1} parent=0 // pred_check
    _
  $region43: #{forward.1} parent=0 // pred_check_branch
    %39 = sbr.rel (0) target = $region45
  $region44: #{forward.1} parent=0 // pred_region
    _
  $region45: #{forward.1} parent=0 // pred_fallthru
    _
  %v40 = vld [vmem:[%s0] sm:$0xff]
  %v41 = vld [vmem:[%s1] sm:$0xff]
  %v42 = vld [vmem:[%s1 + $0x8] sm:$0xff]
  %v43 = vld [vmem:[%s1 + $0x10] sm:$0xff]
  %v44 = vld [vmem:[%s1 + $0x18] sm:$0x1]
  %v45 = vld [vmem:[%s2] sm:$0x1]
  %v47 = vlaneseq
  %v48 = vshrl.u32 %v47, 7
  %v49 = vsub.s32 0, %v48
  %v50 = vrot.slane %v45, %v49
  %vm52 = vcmask 203776
  %v54 = vsel %vm52, %v40, 0
  %vm56 = vcmask 1040384
  %v58 = vsel %vm56, %v44, 0
  %60 = vmatprep.subr.mxu0 0.0
  %61 = vmatpush1.msra.mxu0 0.0
  %62 = vmatprep.subr.mxu0 0.0
  %63 = vmatpush1.msra.mxu0 0.0
  %64 = vmatprep.subr.mxu0 0.0
  %65 = vmatpush1.msra.mxu0 0.0
  %66 = vmatprep.subr.mxu0 0.0
  %67 = vmatpush1.msra.mxu0 0.0
  %68 = vmatprep.subr.mxu0 0.0
  %69 = vmatpush1.msra.mxu0 0.0
  %70 = vmatprep.subr.mxu0 0.0
  %71 = vmatpush1.msra.mxu0 0.0
  %72 = vmatprep.subr.mxu0 0.0
  %73 = vmatpush1.msra.mxu0 0.0
  %74 = vmatprep.subr.mxu0 0.0
  %75 = vmatpush1.msra.mxu0 0.0
  %76 = vmatprep.subr.mxu0 0.0
  %77 = vmatpush1.msra.mxu0 0.0
  %78 = vmatprep.subr.mxu0 0.0
  %79 = vmatpush1.msra.mxu0 0.0
  %80 = vmatprep.subr.mxu0 0.0
  %81 = vmatpush1.msra.mxu0 0.0
  %82 = vmatprep.subr.mxu0 0.0
  %83 = vmatpush1.msra.mxu0 0.0
  %84 = vmatprep.subr.mxu0 0.0
  %85 = vmatpush1.msra.mxu0 %v58
  %86 = vmatprep.subr.mxu0 0.0
  %87 = vmatpush1.msra.mxu0 %v43
  %88 = vmatprep.subr.mxu0 0.0
  %89 = vmatpush1.msra.mxu0 %v42
  %90 = vmatprep.subr.mxu0 0.0
  %91 = vmatpush1.msra.mxu0 %v41
  %92 = vmatprep.subr.mxu0 0.0
  %93 = vmatpush2.msra.mxu0 0.0
  %94 = vmatprep.subr.mxu0 0.0
  %95 = vmatpush2.msra.mxu0 0.0
  %96 = vmatprep.subr.mxu0 0.0
  %97 = vmatpush2.msra.mxu0 0.0
  %98 = vmatprep.subr.mxu0 0.0
  %99 = vmatpush2.msra.mxu0 0.0
  %100 = vmatprep.subr.mxu0 0.0
  %101 = vmatpush2.msra.mxu0 0.0
  %102 = vmatprep.subr.mxu0 0.0
  %103 = vmatpush2.msra.mxu0 0.0
  %104 = vmatprep.subr.mxu0 0.0
  %105 = vmatpush2.msra.mxu0 0.0
  %106 = vmatprep.subr.mxu0 0.0
  %107 = vmatpush2.msra.mxu0 0.0
  %108 = vmatprep.subr.mxu0 0.0
  %109 = vmatpush2.msra.mxu0 0.0
  %110 = vmatprep.subr.mxu0 0.0
  %111 = vmatpush2.msra.mxu0 0.0
  %112 = vmatprep.subr.mxu0 0.0
  %113 = vmatpush2.msra.mxu0 0.0
  %114 = vmatprep.subr.mxu0 0.0
  %115 = vmatpush2.msra.mxu0 0.0
  %116 = vmatprep.subr.mxu0 0.0
  %117 = vmatpush2.msra.mxu0 0.0
  %118 = vmatprep.subr.mxu0 0.0
  %119 = vmatpush2.msra.mxu0 0.0
  %120 = vmatprep.subr.mxu0 0.0
  %121 = vmatpush2.msra.mxu0 0.0
  %122 = vmatprep.subr.mxu0 0.0
  %123 = vmatpush2.msra.mxu0 0.0
  %124 = vmatprep.mubr.f32.mxu0 0.0
  %125 = vmatmul.mubr.f32.gmra.mxu0 %v54
  %v126 = vpop.f32.mrf.mxu0
  %v127 = vadd.f32 %v50, %v126
  %v128 = vpop.f32.mrf.mxu0
  %129 = vdwg.mxu0
  %v130 = vsub.f32 0.0, %v127
  %v131 = vmul.f32 %v130, 1.442695
  %v132 = vpow.pop %v131
  %v133 = vadd.f32 %v132, 1.0
  %v134 = vrcp.pop %v133
  %v135 = vld [vmem:[%s3] sm:$0xff]
  %v136 = vld [vmem:[%s3 + $0x8] sm:$0xff]
  %v137 = vld [vmem:[%s3 + $0x10] sm:$0xff]
  %v138 = vld [vmem:[%s3 + $0x18] sm:$0xff]
  %v139 = vld [vmem:[%s3 + $0x20] sm:$0xff]
  %v140 = vld [vmem:[%s3 + $0x28] sm:$0xff]
  %v141 = vld [vmem:[%s3 + $0x30] sm:$0xff]
  %v142 = vld [vmem:[%s3 + $0x38] sm:$0xff]
  %v143 = vld [vmem:[%s3 + $0x40] sm:$0xff]
  %v144 = vld [vmem:[%s3 + $0x48] sm:$0xff]
  %v145 = vld [vmem:[%s3 + $0x50] sm:$0xff]
  %v146 = vld [vmem:[%s3 + $0x58] sm:$0x3]
  %v147 = vld [vmem:[%s4] sm:$0x1]
  %v149 = vlaneseq
  %v150 = vshrl.u32 %v149, 7
  %v151 = vsub.s32 0, %v150
  %v152 = vrot.slane %v147, %v151
  %vm154 = vcmask 736256
  %v156 = vsel %vm154, %v134, 0
  %vm158 = vcmask 1041408
  %v160 = vsel %vm158, %v146, 0
  %162 = vmatprep.subr.mxu0 0.0
  %163 = vmatpush1.msra.mxu0 0.0
  %164 = vmatprep.subr.mxu0 0.0
  %165 = vmatpush1.msra.mxu0 0.0
  %166 = vmatprep.subr.mxu0 0.0
  %167 = vmatpush1.msra.mxu0 0.0
  %168 = vmatprep.subr.mxu0 0.0
  %169 = vmatpush1.msra.mxu0 0.0
  %170 = vmatprep.subr.mxu0 0.0
  %171 = vmatpush1.msra.mxu0 %v160
  %172 = vmatprep.subr.mxu0 0.0
  %173 = vmatpush1.msra.mxu0 %v145
  %174 = vmatprep.subr.mxu0 0.0
  %175 = vmatpush1.msra.mxu0 %v144
  %176 = vmatprep.subr.mxu0 0.0
  %177 = vmatpush1.msra.mxu0 %v143
  %178 = vmatprep.subr.mxu0 0.0
  %179 = vmatpush1.msra.mxu0 %v142
  %180 = vmatprep.subr.mxu0 0.0
  %181 = vmatpush1.msra.mxu0 %v141
  %182 = vmatprep.subr.mxu0 0.0
  %183 = vmatpush1.msra.mxu0 %v140
  %184 = vmatprep.subr.mxu0 0.0
  %185 = vmatpush1.msra.mxu0 %v139
  %186 = vmatprep.subr.mxu0 0.0
  %187 = vmatpush1.msra.mxu0 %v138
  %188 = vmatprep.subr.mxu0 0.0
  %189 = vmatpush1.msra.mxu0 %v137
  %190 = vmatprep.subr.mxu0 0.0
  %191 = vmatpush1.msra.mxu0 %v136
  %192 = vmatprep.subr.mxu0 0.0
  %193 = vmatpush1.msra.mxu0 %v135
  %194 = vmatprep.subr.mxu0 0.0
  %195 = vmatpush2.msra.mxu0 0.0
  %196 = vmatprep.subr.mxu0 0.0
  %197 = vmatpush2.msra.mxu0 0.0
  %198 = vmatprep.subr.mxu0 0.0
  %199 = vmatpush2.msra.mxu0 0.0
  %200 = vmatprep.subr.mxu0 0.0
  %201 = vmatpush2.msra.mxu0 0.0
  %202 = vmatprep.subr.mxu0 0.0
  %203 = vmatpush2.msra.mxu0 0.0
  %204 = vmatprep.subr.mxu0 0.0
  %205 = vmatpush2.msra.mxu0 0.0
  %206 = vmatprep.subr.mxu0 0.0
  %207 = vmatpush2.msra.mxu0 0.0
  %208 = vmatprep.subr.mxu0 0.0
  %209 = vmatpush2.msra.mxu0 0.0
  %210 = vmatprep.subr.mxu0 0.0
  %211 = vmatpush2.msra.mxu0 0.0
  %212 = vmatprep.subr.mxu0 0.0
  %213 = vmatpush2.msra.mxu0 0.0
  %214 = vmatprep.subr.mxu0 0.0
  %215 = vmatpush2.msra.mxu0 0.0
  %216 = vmatprep.subr.mxu0 0.0
  %217 = vmatpush2.msra.mxu0 0.0
  %218 = vmatprep.subr.mxu0 0.0
  %219 = vmatpush2.msra.mxu0 0.0
  %220 = vmatprep.subr.mxu0 0.0
  %221 = vmatpush2.msra.mxu0 0.0
  %222 = vmatprep.subr.mxu0 0.0
  %223 = vmatpush2.msra.mxu0 0.0
  %224 = vmatprep.subr.mxu0 0.0
  %225 = vmatpush2.msra.mxu0 0.0
  %226 = vmatprep.mubr.f32.mxu0 0.0
  %227 = vmatmul.mubr.f32.gmra.mxu0 %v156
  %v228 = vpop.f32.mrf.mxu0
  %v229 = vadd.f32 %v152, %v228
  %v230 = vpop.f32.mrf.mxu0
  %231 = vdwg.mxu0
  %v232 = vsub.f32 0.0, %v229
  %v233 = vmul.f32 %v232, 1.442695
  %v234 = vpow.pop %v233
  %v235 = vadd.f32 %v234, 1.0
  %v236 = vrcp.pop %v235
  %v237 = vld [vmem:[%s5] sm:$0xff]
  %v238 = vld [vmem:[%s5 + $0x8] sm:$0xff]
  %v239 = vld [vmem:[%s5 + $0x10] sm:$0xff]
  %v240 = vld [vmem:[%s5 + $0x18] sm:$0xff]
  %v241 = vld [vmem:[%s5 + $0x20] sm:$0xff]
  %v242 = vld [vmem:[%s5 + $0x28] sm:$0xff]
  %v243 = vld [vmem:[%s5 + $0x30] sm:$0xff]
  %v244 = vld [vmem:[%s5 + $0x38] sm:$0xff]
  %v245 = vld [vmem:[%s5 + $0x40] sm:$0xff]
  %v246 = vld [vmem:[%s5 + $0x48] sm:$0xff]
  %v247 = vld [vmem:[%s5 + $0x50] sm:$0xff]
  %v248 = vld [vmem:[%s5 + $0x58] sm:$0xff]
  %v249 = vld [vmem:[%s5 + $0x60] sm:$0xff]
  %v250 = vld [vmem:[%s5 + $0x68] sm:$0xff]
  %v251 = vld [vmem:[%s5 + $0x70] sm:$0xff]
  %v252 = vld [vmem:[%s5 + $0x78] sm:$0xff]
  %v253 = vld [vmem:[%s6] sm:$0x1]
  %v255 = vlaneseq
  %v256 = vshrl.u32 %v255, 7
  %v257 = vsub.s32 0, %v256
  %v258 = vrot.slane %v253, %v257
  %260 = vmatprep.subr.mxu0 0.0
  %261 = vmatpush1.msra.mxu0 %v252
  %262 = vmatprep.subr.mxu0 0.0
  %263 = vmatpush1.msra.mxu0 %v251
  %264 = vmatprep.subr.mxu0 0.0
  %265 = vmatpush1.msra.mxu0 %v250
  %266 = vmatprep.subr.mxu0 0.0
  %267 = vmatpush1.msra.mxu0 %v249
  %268 = vmatprep.subr.mxu0 0.0
  %269 = vmatpush1.msra.mxu0 %v248
  %270 = vmatprep.subr.mxu0 0.0
  %271 = vmatpush1.msra.mxu0 %v247
  %272 = vmatprep.subr.mxu0 0.0
  %273 = vmatpush1.msra.mxu0 %v246
  %274 = vmatprep.subr.mxu0 0.0
  %275 = vmatpush1.msra.mxu0 %v245
  %276 = vmatprep.subr.mxu0 0.0
  %277 = vmatpush1.msra.mxu0 %v244
  %278 = vmatprep.subr.mxu0 0.0
  %279 = vmatpush1.msra.mxu0 %v243
  %280 = vmatprep.subr.mxu0 0.0
  %281 = vmatpush1.msra.mxu0 %v242
  %282 = vmatprep.subr.mxu0 0.0
  %283 = vmatpush1.msra.mxu0 %v241
  %284 = vmatprep.subr.mxu0 0.0
  %285 = vmatpush1.msra.mxu0 %v240
  %286 = vmatprep.subr.mxu0 0.0
  %287 = vmatpush1.msra.mxu0 %v239
  %288 = vmatprep.subr.mxu0 0.0
  %289 = vmatpush1.msra.mxu0 %v238
  %290 = vmatprep.subr.mxu0 0.0
  %291 = vmatpush1.msra.mxu0 %v237
  %292 = vmatprep.subr.mxu0 0.0
  %293 = vmatpush2.msra.mxu0 0.0
  %294 = vmatprep.subr.mxu0 0.0
  %295 = vmatpush2.msra.mxu0 0.0
  %296 = vmatprep.subr.mxu0 0.0
  %297 = vmatpush2.msra.mxu0 0.0
  %298 = vmatprep.subr.mxu0 0.0
  %299 = vmatpush2.msra.mxu0 0.0
  %300 = vmatprep.subr.mxu0 0.0
  %301 = vmatpush2.msra.mxu0 0.0
  %302 = vmatprep.subr.mxu0 0.0
  %303 = vmatpush2.msra.mxu0 0.0
  %304 = vmatprep.subr.mxu0 0.0
  %305 = vmatpush2.msra.mxu0 0.0
  %306 = vmatprep.subr.mxu0 0.0
  %307 = vmatpush2.msra.mxu0 0.0
  %308 = vmatprep.subr.mxu0 0.0
  %309 = vmatpush2.msra.mxu0 0.0
  %310 = vmatprep.subr.mxu0 0.0
  %311 = vmatpush2.msra.mxu0 0.0
  %312 = vmatprep.subr.mxu0 0.0
  %313 = vmatpush2.msra.mxu0 0.0
  %314 = vmatprep.subr.mxu0 0.0
  %315 = vmatpush2.msra.mxu0 0.0
  %316 = vmatprep.subr.mxu0 0.0
  %317 = vmatpush2.msra.mxu0 0.0
  %318 = vmatprep.subr.mxu0 0.0
  %319 = vmatpush2.msra.mxu0 0.0
  %320 = vmatprep.subr.mxu0 0.0
  %321 = vmatpush2.msra.mxu0 0.0
  %322 = vmatprep.subr.mxu0 0.0
  %323 = vmatpush2.msra.mxu0 0.0
  %324 = vmatprep.mubr.f32.mxu0 0.0
  %325 = vmatmul.mubr.f32.gmra.mxu0 %v236
  %v326 = vpop.f32.mrf.mxu0
  %v327 = vadd.f32 %v258, %v326
  %v328 = vpop.f32.mrf.mxu0
  %329 = vdwg.mxu0
  %v330 = vsub.f32 0.0, %v327
  %v331 = vmul.f32 %v330, 1.442695
  %v332 = vpow.pop %v331
  %v333 = vadd.f32 %v332, 1.0
  %v334 = vrcp.pop %v333
  %v335 = vld [vmem:[%s7] sm:$0xff]
  %v336 = vld [vmem:[%s7 + $0x8] sm:$0xff]
  %v337 = vld [vmem:[%s8] sm:$0x1]
  %v339 = vlaneseq
  %v340 = vshrl.u32 %v339, 7
  %v341 = vsub.s32 0, %v340
  %v342 = vrot.slane %v337, %v341
  %vm344 = vcmask 130048
  %v346 = vsel %vm344, %v334, 0
  %348 = vmatprep.subr.mxu0 0.0
  %349 = vmatpush1.msra.mxu0 0.0
  %350 = vmatprep.subr.mxu0 0.0
  %351 = vmatpush1.msra.mxu0 0.0
  %352 = vmatprep.subr.mxu0 0.0
  %353 = vmatpush1.msra.mxu0 0.0
  %354 = vmatprep.subr.mxu0 0.0
  %355 = vmatpush1.msra.mxu0 0.0
  %356 = vmatprep.subr.mxu0 0.0
  %357 = vmatpush1.msra.mxu0 0.0
  %358 = vmatprep.subr.mxu0 0.0
  %359 = vmatpush1.msra.mxu0 0.0
  %360 = vmatprep.subr.mxu0 0.0
  %361 = vmatpush1.msra.mxu0 0.0
  %362 = vmatprep.subr.mxu0 0.0
  %363 = vmatpush1.msra.mxu0 0.0
  %364 = vmatprep.subr.mxu0 0.0
  %365 = vmatpush1.msra.mxu0 0.0
  %366 = vmatprep.subr.mxu0 0.0
  %367 = vmatpush1.msra.mxu0 0.0
  %368 = vmatprep.subr.mxu0 0.0
  %369 = vmatpush1.msra.mxu0 0.0
  %370 = vmatprep.subr.mxu0 0.0
  %371 = vmatpush1.msra.mxu0 0.0
  %372 = vmatprep.subr.mxu0 0.0
  %373 = vmatpush1.msra.mxu0 0.0
  %374 = vmatprep.subr.mxu0 0.0
  %375 = vmatpush1.msra.mxu0 0.0
  %376 = vmatprep.subr.mxu0 0.0
  %377 = vmatpush1.msra.mxu0 %v336
  %378 = vmatprep.subr.mxu0 0.0
  %379 = vmatpush1.msra.mxu0 %v335
  %380 = vmatprep.subr.mxu0 0.0
  %381 = vmatpush2.msra.mxu0 0.0
  %382 = vmatprep.subr.mxu0 0.0
  %383 = vmatpush2.msra.mxu0 0.0
  %384 = vmatprep.subr.mxu0 0.0
  %385 = vmatpush2.msra.mxu0 0.0
  %386 = vmatprep.subr.mxu0 0.0
  %387 = vmatpush2.msra.mxu0 0.0
  %388 = vmatprep.subr.mxu0 0.0
  %389 = vmatpush2.msra.mxu0 0.0
  %390 = vmatprep.subr.mxu0 0.0
  %391 = vmatpush2.msra.mxu0 0.0
  %392 = vmatprep.subr.mxu0 0.0
  %393 = vmatpush2.msra.mxu0 0.0
  %394 = vmatprep.subr.mxu0 0.0
  %395 = vmatpush2.msra.mxu0 0.0
  %396 = vmatprep.subr.mxu0 0.0
  %397 = vmatpush2.msra.mxu0 0.0
  %398 = vmatprep.subr.mxu0 0.0
  %399 = vmatpush2.msra.mxu0 0.0
  %400 = vmatprep.subr.mxu0 0.0
  %401 = vmatpush2.msra.mxu0 0.0
  %402 = vmatprep.subr.mxu0 0.0
  %403 = vmatpush2.msra.mxu0 0.0
  %404 = vmatprep.subr.mxu0 0.0
  %405 = vmatpush2.msra.mxu0 0.0
  %406 = vmatprep.subr.mxu0 0.0
  %407 = vmatpush2.msra.mxu0 0.0
  %408 = vmatprep.subr.mxu0 0.0
  %409 = vmatpush2.msra.mxu0 0.0
  %410 = vmatprep.subr.mxu0 0.0
  %411 = vmatpush2.msra.mxu0 0.0
  %412 = vmatprep.mubr.f32.mxu0 0.0
  %413 = vmatmul.mubr.f32.gmra.mxu0 %v346
  %v414 = vpop.f32.mrf.mxu0
  %v415 = vadd.f32 %v342, %v414
  %v416 = vpop.f32.mrf.mxu0
  %417 = vdwg.mxu0
  %v418 = vsub.f32 0.0, %v415
  %v419 = vmul.f32 %v418, 1.442695
  %v420 = vpow.pop %v419
  %v421 = vadd.f32 %v420, 1.0
  %v422 = vrcp.pop %v421
  %v423 = vld [vmem:[%s9] sm:$0xff]
  %v424 = vld [vmem:[#allocation2] sm:$0x1]
  %v426 = vlaneseq
  %v427 = vshrl.u32 %v426, 7
  %v428 = vsub.s32 0, %v427
  %v429 = vrot.slane %v424, %v428
  %vm431 = vcmask 64512
  %v433 = vsel %vm431, %v422, 0
  %435 = vmatprep.subr.mxu0 0.0
  %436 = vmatpush1.msra.mxu0 0.0
  %437 = vmatprep.subr.mxu0 0.0
  %438 = vmatpush1.msra.mxu0 0.0
  %439 = vmatprep.subr.mxu0 0.0
  %440 = vmatpush1.msra.mxu0 0.0
  %441 = vmatprep.subr.mxu0 0.0
  %442 = vmatpush1.msra.mxu0 0.0
  %443 = vmatprep.subr.mxu0 0.0
  %444 = vmatpush1.msra.mxu0 0.0
  %445 = vmatprep.subr.mxu0 0.0
  %446 = vmatpush1.msra.mxu0 0.0
  %447 = vmatprep.subr.mxu0 0.0
  %448 = vmatpush1.msra.mxu0 0.0
  %449 = vmatprep.subr.mxu0 0.0
  %450 = vmatpush1.msra.mxu0 0.0
  %451 = vmatprep.subr.mxu0 0.0
  %452 = vmatpush1.msra.mxu0 0.0
  %453 = vmatprep.subr.mxu0 0.0
  %454 = vmatpush1.msra.mxu0 0.0
  %455 = vmatprep.subr.mxu0 0.0
  %456 = vmatpush1.msra.mxu0 0.0
  %457 = vmatprep.subr.mxu0 0.0
  %458 = vmatpush1.msra.mxu0 0.0
  %459 = vmatprep.subr.mxu0 0.0
  %460 = vmatpush1.msra.mxu0 0.0
  %461 = vmatprep.subr.mxu0 0.0
  %462 = vmatpush1.msra.mxu0 0.0
  %463 = vmatprep.subr.mxu0 0.0
  %464 = vmatpush1.msra.mxu0 0.0
  %465 = vmatprep.subr.mxu0 0.0
  %466 = vmatpush1.msra.mxu0 %v423
  %467 = vmatprep.subr.mxu0 0.0
  %468 = vmatpush2.msra.mxu0 0.0
  %469 = vmatprep.subr.mxu0 0.0
  %470 = vmatpush2.msra.mxu0 0.0
  %471 = vmatprep.subr.mxu0 0.0
  %472 = vmatpush2.msra.mxu0 0.0
  %473 = vmatprep.subr.mxu0 0.0
  %474 = vmatpush2.msra.mxu0 0.0
  %475 = vmatprep.subr.mxu0 0.0
  %476 = vmatpush2.msra.mxu0 0.0
  %477 = vmatprep.subr.mxu0 0.0
  %478 = vmatpush2.msra.mxu0 0.0
  %479 = vmatprep.subr.mxu0 0.0
  %480 = vmatpush2.msra.mxu0 0.0
  %481 = vmatprep.subr.mxu0 0.0
  %482 = vmatpush2.msra.mxu0 0.0
  %483 = vmatprep.subr.mxu0 0.0
  %484 = vmatpush2.msra.mxu0 0.0
  %485 = vmatprep.subr.mxu0 0.0
  %486 = vmatpush2.msra.mxu0 0.0
  %487 = vmatprep.subr.mxu0 0.0
  %488 = vmatpush2.msra.mxu0 0.0
  %489 = vmatprep.subr.mxu0 0.0
  %490 = vmatpush2.msra.mxu0 0.0
  %491 = vmatprep.subr.mxu0 0.0
  %492 = vmatpush2.msra.mxu0 0.0
  %493 = vmatprep.subr.mxu0 0.0
  %494 = vmatpush2.msra.mxu0 0.0
  %495 = vmatprep.subr.mxu0 0.0
  %496 = vmatpush2.msra.mxu0 0.0
  %497 = vmatprep.subr.mxu0 0.0
  %498 = vmatpush2.msra.mxu0 0.0
  %499 = vmatprep.mubr.f32.mxu0 0.0
  %500 = vmatmul.mubr.f32.gmra.mxu0 %v433
  %v501 = vpop.f32.mrf.mxu0
  %v502 = vadd.f32 %v429, %v501
  %v503 = vpop.f32.mrf.mxu0
  %504 = vdwg.mxu0
  %vm505 = vcmask 7168
  %506 = vst.msk [vmem:[%s11] sm:$0xff] %vm505, %v502
  // Predicated region
  $region46: #{forward.1} parent=0 // pred_check
    _
  $region47: #{forward.1} parent=0 // pred_check_branch
    %508 = sbr.rel (0) target = $region49
  $region48: #{forward.1} parent=0 // pred_region
    _
  $region49: #{forward.1} parent=0 // pred_fallthru
    _
  // Predicated region
  $region50: #{forward.1} parent=0 // pred_check
    _
  $region51: #{forward.1} parent=0 // pred_check_branch
    %510 = sbr.rel (0) target = $region53
  $region52: #{forward.1} parent=0 // pred_region
    _
  $region53: #{forward.1} parent=0 // pred_fallthru
    _

</llo_original>
